<compile_context>
chip_gen: v7x
topology: tpu7x:2x2x1
jax: 0.10.0
libtpu: 0.0.40
codegen_flags: <defaults>
</compile_context>

<pallas_src>
import functools

import jax
import jax.numpy as jnp
from jax import lax
from jax.experimental import pallas as pl
from jax.experimental.pallas import tpu as pltpu


def _round_up(x, m):
    return ((x + m - 1) // m) * m


def _cdiv(a, b):
    return -(-a // b)


def _tpu_vmem_and_cores():
    """Best-effort hardware query: (VMEM bytes per core, # TensorCores)."""
    vmem = 64 * 1024 * 1024          # conservative default (v7x per-TC VMEM)
    cores = 1
    try:
        info = pltpu.get_tpu_info()
        v = int(getattr(info, "vmem_capacity_bytes", 0) or 0)
        if v >= 16 * 1024 * 1024:
            vmem = v
        for name in ("num_cores", "core_count", "num_tensorcores",
                     "tensorcore_count"):
            c = getattr(info, name, None)
            if c:
                cores = max(1, int(c))
                break
    except Exception:
        pass
    return vmem, cores


def _maybe_buffered_spec(shape, index_map, depth):
    """BlockSpec with requested pipeline depth, falling back to default (2)."""
    if depth > 2:
        try:
            return pl.BlockSpec(shape, index_map, pipeline_mode=pl.Buffered(depth))
        except Exception:
            pass
    return pl.BlockSpec(shape, index_map)


# --------------------------------------------------------------------------
# Prologue: row-wise L2 normalization + positives (diagonal) term.
# --------------------------------------------------------------------------
def _prologue_kernel(xi_ref, xj_ref, zi_ref, zj_ref, pos_ref, *,
                     temperature, batch, rows, needs_mask):
    xi = xi_ref[...].astype(jnp.float32)
    xj = xj_ref[...].astype(jnp.float32)
    # x / max(||x||, 1e-12) == x * rsqrt(max(sum(x^2), 1e-24)); zero rows
    # (including padding) stay exactly zero, matching PyTorch F.normalize.
    zi = xi * lax.rsqrt(jnp.maximum(jnp.sum(xi * xi, axis=1, keepdims=True), 1e-24))
    zj = xj * lax.rsqrt(jnp.maximum(jnp.sum(xj * xj, axis=1, keepdims=True), 1e-24))
    zi_ref[...] = zi.astype(zi_ref.dtype)
    zj_ref[...] = zj.astype(zj_ref.dtype)
    # Positives: softplus(T - <z_j[r], z_i[r]>) == log(1 + exp(-sim_pos + T)).
    sim_pos = jnp.sum(zi * zj, axis=1, keepdims=True)       # (rows, 1)
    pos = jnp.log1p(jnp.exp(temperature - sim_pos))
    if needs_mask:
        r = (pl.program_id(0) * rows
             + lax.broadcasted_iota(jnp.int32, (rows, 1), 0))
        pos = jnp.where(r < batch, pos, 0.0)
    pos_ref[...] = pos


def _prologue(emb_i, emb_j, *, rows, temperature, batch, needs_mask,
              out_dtype, vmem_limit):
    bp, d = emb_i.shape
    kernel = functools.partial(_prologue_kernel, temperature=temperature,
                               batch=batch, rows=rows, needs_mask=needs_mask)

    def row_spec():
        return pl.BlockSpec((rows, d), lambda i: (i, 0))

    return pl.pallas_call(
        kernel,
        out_shape=(jax.ShapeDtypeStruct((bp, d), out_dtype),      # z_i
                   jax.ShapeDtypeStruct((bp, d), out_dtype),      # z_j
                   jax.ShapeDtypeStruct((bp, 1), jnp.float32)),   # positives
        grid=(bp // rows,),
        in_specs=[row_spec(), row_spec()],
        out_specs=(row_spec(), row_spec(),
                   pl.BlockSpec((rows, 1), lambda i: (i, 0))),
        compiler_params=pltpu.CompilerParams(
            dimension_semantics=("parallel",),
            vmem_limit_bytes=vmem_limit),
    )(emb_i, emb_j)


# --------------------------------------------------------------------------
# Main kernel: negatives sum, one (tm x tn) block of the similarity matrix
# per grid step; resident z_j row block, streamed z_i column block.
# --------------------------------------------------------------------------
def _neg_tiles_kernel(zj_ref, zi_ref, out_ref, *, tm, tn, batch,
                      temperature, edge_i0, edge_k0, needs_mask):
    i = pl.program_id(0)      # sim row tile == z_j row tile    ("parallel")
    k = pl.program_id(1)      # sim col tile == z_i row tile    ("arbitrary")

    @pl.when(k == 0)
    def _init():
        out_ref[...] = jnp.zeros_like(out_ref)

    # sim[a, b] = <z_j[row0+a], z_i[col0+b]>; NT-form contraction (dim 1 of
    # both operands), bf16 operands with f32 MXU accumulation.  Same operand
    # form as the flash-attention kernels -> no per-step transpose of the
    # streamed z_i block, and its HBM stream stays row-contiguous.
    sim = lax.dot_general(zj_ref[...], zi_ref[...],
                          (((1,), (1,)), ((), ())),
                          preferred_element_type=jnp.float32)

    # Negatives: softplus(sim - T).  Diagonal / padded entries are removed
    # only in the branches that actually need it.
    # TODO(synk): for small D (EUP-bound regime) replace log1p(exp(x)) with a
    # bounded-domain VPU polynomial (cosine sims are in [-1, 1]).
    neg = jnp.log1p(jnp.exp(sim - temperature))

    row0 = i * tm
    col0 = k * tn
    is_diag = jnp.logical_and(col0 >= row0, col0 < row0 + tm)
    not_diag = jnp.logical_not(is_diag)

    def fold8(x):
        # (tm, tn) f32 -> (8, tn) per-sublane partial sums; pure VALU adds,
        # sublane-group aligned so the reshape is layout-preserving.
        return jnp.sum(x.reshape(tm // 8, 8, tn), axis=0)

    def eye_mask():
        r = lax.broadcasted_iota(jnp.int32, (tm, tn), 0)
        c = lax.broadcasted_iota(jnp.int32, (tm, tn), 1)
        return r == c + (col0 - row0)

    def valid_mask():
        r = row0 + lax.broadcasted_iota(jnp.int32, (tm, tn), 0)
        c = col0 + lax.broadcasted_iota(jnp.int32, (tm, tn), 1)
        return jnp.logical_and(r < batch, c < batch)

    if needs_mask:
        # Padded rows only appear in row tiles >= edge_i0, padded cols only
        # in col tiles >= edge_k0 (static ints), so interior tiles skip all
        # mask arithmetic.
        is_edge = jnp.logical_or(i >= edge_i0, k >= edge_k0)
        not_edge = jnp.logical_not(is_edge)

        @pl.when(jnp.logical_and(not_diag, not_edge))
        def _interior():
            out_ref[0] += fold8(neg)

        @pl.when(jnp.logical_and(not_diag, is_edge))
        def _edge():
            out_ref[0] += fold8(jnp.where(valid_mask(), neg, 0.0))

        @pl.when(jnp.logical_and(is_diag, not_edge))
        def _diag():
            out_ref[0] += fold8(jnp.where(eye_mask(), 0.0, neg))

        @pl.when(jnp.logical_and(is_diag, is_edge))
        def _diag_edge():
            keep = jnp.logical_and(jnp.logical_not(eye_mask()), valid_mask())
            out_ref[0] += fold8(jnp.where(keep, neg, 0.0))
    else:
        @pl.when(not_diag)
        def _interior():
            out_ref[0] += fold8(neg)

        @pl.when(is_diag)
        def _diag():
            out_ref[0] += fold8(jnp.where(eye_mask(), 0.0, neg))


# --------------------------------------------------------------------------
# Wrapper
# --------------------------------------------------------------------------
def intermodal_loss(emb_i, emb_j, *, temperature=0.2, hyper_gamma=0.5,
                    matmul_dtype=jnp.bfloat16, col_tile=256, max_row_tile=2048):
    """Pallas implementation of InterModalLoss.forward.  Returns an f32 scalar."""
    assert emb_i.shape == emb_j.shape and emb_i.ndim == 2
    b, d = emb_i.shape
    in_bytes = jnp.dtype(emb_i.dtype).itemsize
    db = jnp.dtype(matmul_dtype).itemsize

    # Per-generation VMEM budget (v7x: 64 MiB/TC; v5e/v6e: 128 MiB).
    vmem_cap, cores = _tpu_vmem_and_cores()
    tile_budget = int(vmem_cap * 0.6)      # buffers are sized against this
    vmem_limit = int(vmem_cap * 0.75)      # scoped-VMEM limit handed to Mosaic

    # ---- tile selection ----------------------------------------------------
    sub = 16 if db < 4 else 8
    tn = min(col_tile, _round_up(b, sub))
    tn = max(sub, (tn // sub) * sub)                    # streamed z_i col tile

    # z_i is re-streamed bp/tm times from HBM, so make the resident z_j row
    # tile tm = m * tn as large as the VMEM budget allows.
    fixed = 3 * tn * d * db + 2 * 8 * tn * 4            # z_i (3 bufs) + out (2 bufs)
    per_tm = 2 * d * db + 16 * tn                       # z_j (2 bufs) + f32 staging
    if tile_budget > fixed:
        m_by_vmem = max(1, (tile_budget - fixed) // (per_tm * tn))
    else:
        m_by_vmem = 1
    m_cap = max(1, min(m_by_vmem, max(1, max_row_tile // tn)))

    n_col = _cdiv(b, tn)
    best_score, best_m = None, 1
    for m_try in range(1, min(m_cap, n_col) + 1):
        bp_try = _cdiv(n_col, m_try) * m_try * tn
        # compute ~ bp^2; z_i HBM re-stream ~ bp^2 * c / m  (c ~ stream:MXU ratio)
        score = float(bp_try) * float(bp_try) * max(1.0, 2.5 / m_try)
        if best_score is None or score <= best_score:
            best_score, best_m = score, m_try
    m = best_m
    tm = m * tn
    bp = _cdiv(b, tm) * tm                               # multiple of tm and tn

    needs_mask = bp != b
    if needs_mask:
        pad = ((0, bp - b), (0, 0))
        emb_i = jnp.pad(emb_i, pad)      # zero rows stay zero after normalize
        emb_j = jnp.pad(emb_j, pad)

    # ---- prologue: normalize + positives (single fused call) ---------------
    n_colp = bp // tn
    row_bytes = (4 * in_bytes + 4 * db + 24) * d
    rows_cap = max(tn, min(1024, tile_budget // max(row_bytes, 1)))
    norm_rows = tn
    for c in range(1, n_colp + 1):
        if n_colp % c == 0 and c * tn <= rows_cap:
            norm_rows = c * tn

    z_i, z_j, pos = _prologue(emb_i, emb_j, rows=norm_rows,
                              temperature=float(temperature), batch=b,
                              needs_mask=needs_mask, out_dtype=matmul_dtype,
                              vmem_limit=vmem_limit)

    # ---- main kernel: negatives --------------------------------------------
    n_i = bp // tm
    n_k = bp // tn
    depth = 3 if n_k >= 3 else 2

    kernel = functools.partial(
        _neg_tiles_kernel, tm=tm, tn=tn, batch=b,
        temperature=float(temperature),
        edge_i0=b // tm, edge_k0=b // tn, needs_mask=needs_mask)

    if cores > 1 and n_i >= cores and n_i % cores == 0:
        dim_sem = (pltpu.CORE_PARALLEL, pltpu.ARBITRARY)    # v7x: 2 TCs/chip
    else:
        dim_sem = ("parallel", "arbitrary")                 # no-op on v5e/v6e

    # TODO(synk): for very large feature dims, stream D as an innermost
    # "arbitrary" grid axis with a (tm, tn) f32 VMEM sim accumulator.
    # TODO(synk): optional fp8 operand path on v7x (halves the z_i stream).
    neg_parts = pl.pallas_call(
        kernel,
        out_shape=jax.ShapeDtypeStruct((n_i, 8, tn), jnp.float32),
        grid=(n_i, n_k),
        in_specs=[pl.BlockSpec((tm, d), lambda i, k: (i, 0)),          # z_j resident
                  _maybe_buffered_spec((tn, d), lambda i, k: (k, 0),   # z_i streamed
                                       depth)],
        out_specs=pl.BlockSpec((1, 8, tn), lambda i, k: (i, 0, 0)),
        compiler_params=pltpu.CompilerParams(
            dimension_semantics=dim_sem, vmem_limit_bytes=vmem_limit),
    )(z_j, z_i)

    pos_sum = jnp.sum(pos)
    neg_sum = jnp.sum(neg_parts)
    hg = float(hyper_gamma)
    loss = hg * pos_sum / b + (1.0 - hg) * neg_sum / (b * (b - 1))
    return loss.astype(jnp.float32)


# --------------------------------------------------------------------------
# Pure-JAX reference mirroring the PyTorch module.
# --------------------------------------------------------------------------
def _reference_loss(emb_i, emb_j, temperature=0.2, hyper_gamma=0.5):
    b = emb_i.shape[0]
    z_i = emb_i / jnp.maximum(jnp.linalg.norm(emb_i, axis=1, keepdims=True), 1e-12)
    z_j = emb_j / jnp.maximum(jnp.linalg.norm(emb_j, axis=1, keepdims=True), 1e-12)
    sim = z_j @ z_i.T
    sim_pos = jnp.diag(sim)
    pos = jnp.log(1.0 + jnp.exp(-sim_pos + temperature))
    mask = 1.0 - jnp.eye(b, dtype=jnp.float32)
    neg = jnp.log(1.0 + mask * jnp.exp(sim - temperature))
    return (hyper_gamma * jnp.sum(pos) / b
            + (1.0 - hyper_gamma) * jnp.sum(neg) / (b * (b - 1)))


if __name__ == "__main__":
    k0, k1, k2, k3 = jax.random.split(jax.random.PRNGKey(0), 4)

    # Case 1: module-sized inputs (batch=8, hidden=32).
    emb_i = jax.random.normal(k0, (8, 32), dtype=jnp.float32)
    emb_j = jax.random.normal(k1, (8, 32), dtype=jnp.float32)
    ref = _reference_loss(emb_i, emb_j)

    # Strict numerical check: f32 MXU operands (no padding path).
    loss_f32 = jax.jit(functools.partial(
        intermodal_loss, matmul_dtype=jnp.float32))(emb_i, emb_j)
    jax.block_until_ready(loss_f32)
    assert jnp.allclose(loss_f32, ref, rtol=1e-5, atol=1e-5), (loss_f32, ref)

    # Default fast path: bf16 MXU operands with f32 accumulation (also
    # exercises the ragged-batch padding/masking path since 8 -> 16).
    loss_bf16 = jax.jit(intermodal_loss)(emb_i, emb_j)
    jax.block_until_ready(loss_bf16)
    assert jnp.allclose(loss_bf16, ref, rtol=1e-2, atol=5e-3), (loss_bf16, ref)

    # Case 2: multi-tile grid with a ragged batch -- exercises the decoupled
    # tm/tn tiling, interior/edge/diagonal branches, the Buffered(3) streamed
    # operand and the padding masks.
    emb_i2 = jax.random.normal(k2, (72, 32), dtype=jnp.float32)
    emb_j2 = jax.random.normal(k3, (72, 32), dtype=jnp.float32)
    ref2 = _reference_loss(emb_i2, emb_j2)
    loss2 = jax.jit(functools.partial(
        intermodal_loss, col_tile=16, max_row_tile=32))(emb_i2, emb_j2)
    jax.block_until_ready(loss2)
    assert jnp.allclose(loss2, ref2, rtol=1e-2, atol=1e-2), (loss2, ref2)

    print("KERNEL_OK")
</pallas_src>

<mosaic_0001>
module attributes {stable_mosaic.version = 11 : i64} {
  func.func @_neg_tiles_kernel(%arg0: i32, %arg1: i32, %arg2: memref<8x32xf32, #tpu.memory_space<vmem>>, %arg3: memref<8x32xf32, #tpu.memory_space<vmem>>, %arg4: memref<1x8x8xf32, #tpu.memory_space<vmem>>) attributes {dimension_semantics = [#tpu.dimension_semantics<parallel>, #tpu.dimension_semantics<arbitrary>], iteration_bounds = array<i64: 1, 1>, scalar_prefetch = 0 : i64, scratch_operands = 0 : i64, tpu.core_type = #tpu.core_type<tc>, window_params = [{transform_indices = @transform_0, window_bounds = array<i64: 8, 32>}, {transform_indices = @transform_1, window_bounds = array<i64: 8, 32>}, {transform_indices = @transform_2, window_bounds = array<i64: 1, 8, 8>}]} {
    %c0_i32 = arith.constant 0 : i32
    %0 = arith.cmpi eq, %arg1, %c0_i32 : i32
    %1 = arith.extui %0 : i1 to i32
    %c0_i32_0 = arith.constant 0 : i32
    %2 = arith.cmpi ne, %1, %c0_i32_0 : i32
    scf.if %2 {
      %cst_9 = arith.constant 0.000000e+00 : f32
      %21 = vector.broadcast %cst_9 : f32 to vector<1x8x8xf32>
      %c0_10 = arith.constant 0 : index
      %c0_11 = arith.constant 0 : index
      %c0_12 = arith.constant 0 : index
      %22 = vector.load %arg4[%c0_10, %c0_11, %c0_12] : memref<1x8x8xf32, #tpu.memory_space<vmem>>, vector<1x8x8xf32>
      tpu.vector_store %arg4[%c0_10, %c0_11, %c0_12], %21 {strides = array<i32>} : memref<1x8x8xf32, #tpu.memory_space<vmem>>, vector<1x8x8xf32>,
    } else {
    }
    %c0 = arith.constant 0 : index
    %c0_1 = arith.constant 0 : index
    %3 = vector.load %arg2[%c0, %c0_1] : memref<8x32xf32, #tpu.memory_space<vmem>>, vector<8x32xf32>
    %c0_2 = arith.constant 0 : index
    %c0_3 = arith.constant 0 : index
    %4 = vector.load %arg3[%c0_2, %c0_3] : memref<8x32xf32, #tpu.memory_space<vmem>>, vector<8x32xf32>
    %cst = arith.constant dense<0.000000e+00> : vector<8x8xf32>
    %5 = tpu.matmul %3, %4, %cst {dimension_numbers = #tpu.dot_dimension_numbers<[1], [1], [0], [0], [0, 0, 1, 0], [], []>} : vector<8x32xf32>, vector<8x32xf32>, vector<8x8xf32> -> vector<8x8xf32>
    %cst_4 = arith.constant 2.000000e-01 : f32
    %6 = vector.broadcast %cst_4 : f32 to vector<8x8xf32>
    %7 = arith.subf %5, %6 : vector<8x8xf32>
    %8 = math.exp %7 : vector<8x8xf32>
    %9 = math.log1p %8 : vector<8x8xf32>
    %c8_i32 = arith.constant 8 : i32
    %10 = arith.muli %arg0, %c8_i32 : i32
    %c8_i32_5 = arith.constant 8 : i32
    %11 = arith.muli %arg1, %c8_i32_5 : i32
    %12 = arith.cmpi sge, %11, %10 : i32
    %c8_i32_6 = arith.constant 8 : i32
    %13 = arith.addi %10, %c8_i32_6 : i32
    %14 = arith.cmpi slt, %11, %13 : i32
    %15 = arith.andi %12, %14 : i1
    %true = arith.constant true
    %16 = arith.xori %15, %true : i1
    %17 = arith.extui %16 : i1 to i32
    %c0_i32_7 = arith.constant 0 : i32
    %18 = arith.cmpi ne, %17, %c0_i32_7 : i32
    scf.if %18 {
      %c0_9 = arith.constant 0 : index
      %c0_10 = arith.constant 0 : index
      %c0_11 = arith.constant 0 : index
      %21 = vector.load %arg4[%c0_9, %c0_10, %c0_11] : memref<1x8x8xf32, #tpu.memory_space<vmem>>, vector<1x8x8xf32>
      %22 = vector.shape_cast %21 : vector<1x8x8xf32> to vector<8x8xf32>
      %23 = vector.shape_cast %9 : vector<8x8xf32> to vector<1x8x8xf32>
      %cst_12 = arith.constant dense<0.000000e+00> : vector<8x8xf32>
      %24 = vector.multi_reduction <add>, %23, %cst_12 [0] : vector<1x8x8xf32> to vector<8x8xf32>
      %25 = arith.addf %22, %24 : vector<8x8xf32>
      %c0_13 = arith.constant 0 : index
      %c0_14 = arith.constant 0 : index
      %c0_15 = arith.constant 0 : index
      %26 = vector.load %arg4[%c0_13, %c0_14, %c0_15] : memref<1x8x8xf32, #tpu.memory_space<vmem>>, vector<1x8x8xf32>
      %27 = vector.shape_cast %26 : vector<1x8x8xf32> to vector<8x8xf32>
      %28 = vector.shape_cast %25 : vector<8x8xf32> to vector<1x8x8xf32>
      tpu.vector_store %arg4[%c0_13, %c0_14, %c0_15], %28 {strides = array<i32>} : memref<1x8x8xf32, #tpu.memory_space<vmem>>, vector<1x8x8xf32>,
    } else {
    }
    %19 = arith.extui %15 : i1 to i32
    %c0_i32_8 = arith.constant 0 : i32
    %20 = arith.cmpi ne, %19, %c0_i32_8 : i32
    scf.if %20 {
      %c0_9 = arith.constant 0 : index
      %c0_10 = arith.constant 0 : index
      %c0_11 = arith.constant 0 : index
      %21 = vector.load %arg4[%c0_9, %c0_10, %c0_11] : memref<1x8x8xf32, #tpu.memory_space<vmem>>, vector<1x8x8xf32>
      %22 = vector.shape_cast %21 : vector<1x8x8xf32> to vector<8x8xf32>
      %23 = tpu.iota {dimensions = array<i32: 0>} : vector<8x8xi32>
      %24 = tpu.iota {dimensions = array<i32: 1>} : vector<8x8xi32>
      %25 = arith.subi %11, %10 : i32
      %26 = vector.broadcast %25 : i32 to vector<8x8xi32>
      %27 = arith.addi %24, %26 : vector<8x8xi32>
      %28 = arith.cmpi eq, %23, %27 : vector<8x8xi32>
      %cst_12 = arith.constant 0.000000e+00 : f32
      %29 = vector.broadcast %cst_12 : f32 to vector<8x8xf32>
      %30 = arith.select %28, %29, %9 : vector<8x8xi1>, vector<8x8xf32>
      %31 = vector.shape_cast %30 : vector<8x8xf32> to vector<1x8x8xf32>
      %cst_13 = arith.constant dense<0.000000e+00> : vector<8x8xf32>
      %32 = vector.multi_reduction <add>, %31, %cst_13 [0] : vector<1x8x8xf32> to vector<8x8xf32>
      %33 = arith.addf %22, %32 : vector<8x8xf32>
      %c0_14 = arith.constant 0 : index
      %c0_15 = arith.constant 0 : index
      %c0_16 = arith.constant 0 : index
      %34 = vector.load %arg4[%c0_14, %c0_15, %c0_16] : memref<1x8x8xf32, #tpu.memory_space<vmem>>, vector<1x8x8xf32>
      %35 = vector.shape_cast %34 : vector<1x8x8xf32> to vector<8x8xf32>
      %36 = vector.shape_cast %33 : vector<8x8xf32> to vector<1x8x8xf32>
      tpu.vector_store %arg4[%c0_14, %c0_15, %c0_16], %36 {strides = array<i32>} : memref<1x8x8xf32, #tpu.memory_space<vmem>>, vector<1x8x8xf32>,
    } else {
    }
    return
  }
  func.func @transform_0(%arg0: i32, %arg1: i32) -> (i32, i32) {
    %c0_i32 = arith.constant 0 : i32
    %c0_i32_0 = arith.constant 0 : i32
    return %arg0, %c0_i32 : i32, i32
  }
  func.func @transform_1(%arg0: i32, %arg1: i32) -> (i32, i32) {
    %c0_i32 = arith.constant 0 : i32
    %c0_i32_0 = arith.constant 0 : i32
    return %arg1, %c0_i32 : i32, i32
  }
  func.func @transform_2(%arg0: i32, %arg1: i32) -> (i32, i32, i32) {
    %c0_i32 = arith.constant 0 : i32
    %c0_i32_0 = arith.constant 0 : i32
    %c0_i32_1 = arith.constant 0 : i32
    return %arg0, %c0_i32, %c0_i32_0 : i32, i32, i32
  }
}

module attributes {stable_mosaic.version = 11 : i64} {
  func.func @_prologue_kernel(%arg0: i32, %arg1: memref<8x32xf32, #tpu.memory_space<vmem>>, %arg2: memref<8x32xf32, #tpu.memory_space<vmem>>, %arg3: memref<8x32xf32, #tpu.memory_space<vmem>>, %arg4: memref<8x32xf32, #tpu.memory_space<vmem>>, %arg5: memref<8x1xf32, #tpu.memory_space<vmem>>) attributes {dimension_semantics = [#tpu.dimension_semantics<parallel>], iteration_bounds = array<i64: 1>, scalar_prefetch = 0 : i64, scratch_operands = 0 : i64, tpu.core_type = #tpu.core_type<tc>, window_params = [{transform_indices = @transform_0, window_bounds = array<i64: 8, 32>}, {transform_indices = @transform_1, window_bounds = array<i64: 8, 32>}, {transform_indices = @transform_2, window_bounds = array<i64: 8, 32>}, {transform_indices = @transform_3, window_bounds = array<i64: 8, 32>}, {transform_indices = @transform_4, window_bounds = array<i64: 8, 1>}]} {
    %c0 = arith.constant 0 : index
    %c0_0 = arith.constant 0 : index
    %0 = vector.load %arg1[%c0, %c0_0] : memref<8x32xf32, #tpu.memory_space<vmem>>, vector<8x32xf32>
    %c0_1 = arith.constant 0 : index
    %c0_2 = arith.constant 0 : index
    %1 = vector.load %arg2[%c0_1, %c0_2] : memref<8x32xf32, #tpu.memory_space<vmem>>, vector<8x32xf32>
    %2 = arith.mulf %0, %0 : vector<8x32xf32>
    %cst = arith.constant dense<0.000000e+00> : vector<8xf32>
    %3 = vector.multi_reduction <add>, %2, %cst [1] : vector<8x32xf32> to vector<8xf32>
    %4 = vector.shape_cast %3 : vector<8xf32> to vector<8x1xf32>
    %cst_3 = arith.constant 1.000000e-24 : f32
    %5 = vector.broadcast %cst_3 : f32 to vector<8x1xf32>
    %6 = arith.maximumf %4, %5 : vector<8x1xf32>
    %7 = math.rsqrt %6 : vector<8x1xf32>
    %8 = vector.broadcast %7 : vector<8x1xf32> to vector<8x32xf32>
    %9 = arith.mulf %0, %8 : vector<8x32xf32>
    %10 = arith.mulf %1, %1 : vector<8x32xf32>
    %cst_4 = arith.constant dense<0.000000e+00> : vector<8xf32>
    %11 = vector.multi_reduction <add>, %10, %cst_4 [1] : vector<8x32xf32> to vector<8xf32>
    %12 = vector.shape_cast %11 : vector<8xf32> to vector<8x1xf32>
    %cst_5 = arith.constant 1.000000e-24 : f32
    %13 = vector.broadcast %cst_5 : f32 to vector<8x1xf32>
    %14 = arith.maximumf %12, %13 : vector<8x1xf32>
    %15 = math.rsqrt %14 : vector<8x1xf32>
    %16 = vector.broadcast %15 : vector<8x1xf32> to vector<8x32xf32>
    %17 = arith.mulf %1, %16 : vector<8x32xf32>
    %c0_6 = arith.constant 0 : index
    %c0_7 = arith.constant 0 : index
    %18 = vector.load %arg3[%c0_6, %c0_7] : memref<8x32xf32, #tpu.memory_space<vmem>>, vector<8x32xf32>
    tpu.vector_store %arg3[%c0_6, %c0_7], %9 {strides = array<i32>} : memref<8x32xf32, #tpu.memory_space<vmem>>, vector<8x32xf32>,
    %c0_8 = arith.constant 0 : index
    %c0_9 = arith.constant 0 : index
    %19 = vector.load %arg4[%c0_8, %c0_9] : memref<8x32xf32, #tpu.memory_space<vmem>>, vector<8x32xf32>
    tpu.vector_store %arg4[%c0_8, %c0_9], %17 {strides = array<i32>} : memref<8x32xf32, #tpu.memory_space<vmem>>, vector<8x32xf32>,
    %20 = arith.mulf %9, %17 : vector<8x32xf32>
    %cst_10 = arith.constant dense<0.000000e+00> : vector<8xf32>
    %21 = vector.multi_reduction <add>, %20, %cst_10 [1] : vector<8x32xf32> to vector<8xf32>
    %22 = vector.shape_cast %21 : vector<8xf32> to vector<8x1xf32>
    %cst_11 = arith.constant 2.000000e-01 : f32
    %23 = vector.broadcast %cst_11 : f32 to vector<8x1xf32>
    %24 = arith.subf %23, %22 : vector<8x1xf32>
    %25 = math.exp %24 : vector<8x1xf32>
    %26 = math.log1p %25 : vector<8x1xf32>
    %c0_12 = arith.constant 0 : index
    %c0_13 = arith.constant 0 : index
    %27 = vector.load %arg5[%c0_12, %c0_13] : memref<8x1xf32, #tpu.memory_space<vmem>>, vector<8x1xf32>
    tpu.vector_store %arg5[%c0_12, %c0_13], %26 {strides = array<i32>} : memref<8x1xf32, #tpu.memory_space<vmem>>, vector<8x1xf32>,
    return
  }
  func.func @transform_0(%arg0: i32) -> (i32, i32) {
    %c0_i32 = arith.constant 0 : i32
    %c0_i32_0 = arith.constant 0 : i32
    return %arg0, %c0_i32 : i32, i32
  }
  func.func @transform_1(%arg0: i32) -> (i32, i32) {
    %c0_i32 = arith.constant 0 : i32
    %c0_i32_0 = arith.constant 0 : i32
    return %arg0, %c0_i32 : i32, i32
  }
  func.func @transform_2(%arg0: i32) -> (i32, i32) {
    %c0_i32 = arith.constant 0 : i32
    %c0_i32_0 = arith.constant 0 : i32
    return %arg0, %c0_i32 : i32, i32
  }
  func.func @transform_3(%arg0: i32) -> (i32, i32) {
    %c0_i32 = arith.constant 0 : i32
    %c0_i32_0 = arith.constant 0 : i32
    return %arg0, %c0_i32 : i32, i32
  }
  func.func @transform_4(%arg0: i32) -> (i32, i32) {
    %c0_i32 = arith.constant 0 : i32
    %c0_i32_0 = arith.constant 0 : i32
    return %arg0, %c0_i32 : i32, i32
  }
}

</mosaic_0001>

<llo_original>
// kernel: intermodal_loss.3
$region0: #{intermodal_loss.3}
  #allocation0 [shape = 'u32[]', space=smem, size = 0x4, offset = 0x4, fixed_abs, tag = 'smem constant byte address 0x4 - core index']
  #allocation1 [shape = 'u32[144,128]{1,0:T(1,128)}', space=vmem, size = 0x12000, scoped, tag = 'internal scratch']
  %s0 = inlined_call_operand.vmem [shape: f32[8,32], index: 0, kind: input, shape index: {}]
  %s1 = inlined_call_operand.vmem [shape: f32[8,32], index: 1, kind: input, shape index: {}]
  %s2 = inlined_call_operand.vmem [shape: f32[1,8,8], index: 2, kind: output, shape index: {}]
  %s3 = sld [smem:[#allocation0]]
  $region30: #{intermodal_loss.3} parent=0
    _
  %s5 = ssub.s32 1, %s3
  %s6 = scalar_select 0, %s5, %s3
  // Predicated region
  $region2: #{intermodal_loss.3} parent=0 // pred_check
    _
  $region3: #{intermodal_loss.3} parent=0 // pred_check_branch
    %8 = sbr.rel (0) target = $region5
  $region4: #{intermodal_loss.3} parent=0 // pred_region
    _
  $region5: #{intermodal_loss.3} parent=0 // pred_fallthru
    _
  // Predicated region
  $region6: #{intermodal_loss.3} parent=0 // pred_check
    _
  $region7: #{intermodal_loss.3} parent=0 // pred_check_branch
    %10 = sbr.rel (0) target = $region9
  $region8: #{intermodal_loss.3} parent=0 // pred_region
    _
  $region9: #{intermodal_loss.3} parent=0 // pred_fallthru
    _
  %p11 = scmp.eq.s32.totalorder 0, 0
  // Predicated region
  $region10: #{intermodal_loss.3} parent=0 // pred_check
    %p12 = pneg %p11
  $region11: #{intermodal_loss.3} parent=0 // pred_check_branch
    %14 = sbr.rel (%p12) target = $region13
  $region12: #{intermodal_loss.3} parent=0 // pred_region
    %vm15 = vcmask 64512
    %16 = vst.msk [vmem:[%s2] sm:$0xff] %vm15, 0.0
  $region13: #{intermodal_loss.3} parent=0 // pred_fallthru
    _
  %v17 = vld [vmem:[%s0] sm:$0xff]
  %v18 = vld [vmem:[%s1] sm:$0xff]
  %vm19 = vcmask 261120
  %v21 = vsel %vm19, %v17, 0
  %v24 = vsel %vm19, %v18, 0
  %26 = vmatprep.subr.mxu0 0.0
  %27 = vmatpush1.xpose.msra.mxu0 %v24
  %28 = vmatprep.subr.mxu0 0.0
  %29 = vmatpush1.xpose.msra.mxu0 0.0
  %30 = vmatprep.subr.mxu0 0.0
  %31 = vmatpush1.xpose.msra.mxu0 0.0
  %32 = vmatprep.subr.mxu0 0.0
  %33 = vmatpush1.xpose.msra.mxu0 0.0
  %34 = vmatprep.subr.mxu0 0.0
  %35 = vmatpush1.xpose.msra.mxu0 0.0
  %36 = vmatprep.subr.mxu0 0.0
  %37 = vmatpush1.xpose.msra.mxu0 0.0
  %38 = vmatprep.subr.mxu0 0.0
  %39 = vmatpush1.xpose.msra.mxu0 0.0
  %40 = vmatprep.subr.mxu0 0.0
  %41 = vmatpush1.xpose.msra.mxu0 0.0
  %42 = vmatprep.subr.mxu0 0.0
  %43 = vmatpush1.xpose.msra.mxu0 0.0
  %44 = vmatprep.subr.mxu0 0.0
  %45 = vmatpush1.xpose.msra.mxu0 0.0
  %46 = vmatprep.subr.mxu0 0.0
  %47 = vmatpush1.xpose.msra.mxu0 0.0
  %48 = vmatprep.subr.mxu0 0.0
  %49 = vmatpush1.xpose.msra.mxu0 0.0
  %50 = vmatprep.subr.mxu0 0.0
  %51 = vmatpush1.xpose.msra.mxu0 0.0
  %52 = vmatprep.subr.mxu0 0.0
  %53 = vmatpush1.xpose.msra.mxu0 0.0
  %54 = vmatprep.subr.mxu0 0.0
  %55 = vmatpush1.xpose.msra.mxu0 0.0
  %56 = vmatprep.subr.mxu0 0.0
  %57 = vmatpush1.xpose.msra.mxu0 0.0
  %58 = vmatprep.subr.mxu0 0.0
  %59 = vmatpush1.xpose.msra.mxu0 0.0
  %60 = vmatprep.subr.mxu0 0.0
  %61 = vmatpush1.xpose.msra.mxu0 0.0
  %62 = vmatprep.subr.mxu0 0.0
  %63 = vmatpush1.xpose.msra.mxu0 0.0
  %64 = vmatprep.subr.mxu0 0.0
  %65 = vmatpush1.xpose.msra.mxu0 0.0
  %66 = vmatprep.subr.mxu0 0.0
  %67 = vmatpush1.xpose.msra.mxu0 0.0
  %68 = vmatprep.subr.mxu0 0.0
  %69 = vmatpush1.xpose.msra.mxu0 0.0
  %70 = vmatprep.subr.mxu0 0.0
  %71 = vmatpush1.xpose.msra.mxu0 0.0
  %72 = vmatprep.subr.mxu0 0.0
  %73 = vmatpush1.xpose.msra.mxu0 0.0
  %74 = vmatprep.subr.mxu0 0.0
  %75 = vmatpush1.xpose.msra.mxu0 0.0
  %76 = vmatprep.subr.mxu0 0.0
  %77 = vmatpush1.xpose.msra.mxu0 0.0
  %78 = vmatprep.subr.mxu0 0.0
  %79 = vmatpush1.xpose.msra.mxu0 0.0
  %80 = vmatprep.subr.mxu0 0.0
  %81 = vmatpush1.xpose.msra.mxu0 0.0
  %82 = vmatprep.subr.mxu0 0.0
  %83 = vmatpush1.xpose.msra.mxu0 0.0
  %84 = vmatprep.subr.mxu0 0.0
  %85 = vmatpush1.xpose.msra.mxu0 0.0
  %86 = vmatprep.subr.mxu0 0.0
  %87 = vmatpush1.xpose.msra.mxu0 0.0
  %88 = vmatprep.subr.mxu0 0.0
  %89 = vmatpush1.xpose.msra.mxu0 0.0
  %90 = vmatprep.mubr.f32.mxu0 0.0
  %91 = vmatmul.mubr.f32.gmra.mrb[0].mxu0 %v21
  %v92 = vpop.f32.mrb[0].mxu0
  %v93 = vadd.f32 0.0, %v92
  %v94 = vpop.f32.mrb[0].mxu0
  %95 = vdwg.mxu0
  %v96 = vsub.f32 %v93, 0.2
  %v97 = vmul.f32 %v96, 1.442695
  %v98 = vpow.pop %v97
  %v99 = vadd.f32 %v98, 1.0
  %v100 = vlog2.pop %v99
  %v101 = vmul.f32 %v100, 0.6931472
  %v102 = vmul.f32 -0.5, %v98
  %v103 = vadd.f32 %v102, 1.0
  %v104 = vmul.f32 %v103, %v98
  %v105 = vand.u32 2147483647, %v98
  %vm106 = vcmp.lt.f32.partialorder %v105, 0.0004427343
  %v107 = vsel %vm106, %v104, %v101
  %s108 = smul.u32 0, 8
  %s109 = smul.u32 0, 8
  %p110 = scmp.ge.s32.totalorder %s109, %s108
  %s111 = sadd.s32 %s108, 8
  %p112 = scmp.lt.s32.totalorder %s109, %s111
  %p113 = pnand %p110, %p112
  %p114 = pneg %p113
  // Predicated region
  $region14: #{intermodal_loss.3} parent=0 // pred_check
    _
  $region15: #{intermodal_loss.3} parent=0 // pred_check_branch
    %116 = sbr.rel (%p113) target = $region17
  $region16: #{intermodal_loss.3} parent=0 // pred_region
    %v117 = vld [vmem:[%s2] sm:$0xff]
    %v118 = vlaneseq
    %v119 = vshrl.u32 %v118, 7
    %v120 = vlaneseq
    %v121 = vand.u32 %v120, 127
    %s122 = ssub.s32 %s109, %s108
    %v123 = vstv %s122
    %v124 = vadd.s32 %v121, %v123
    %vm125 = vcmp.eq.s32.totalorder %v119, %v124
    %v126 = vsel %vm125, 0.0, %v107
    %v127 = vadd.f32 %v126, 0.0
    %v128 = vadd.f32 %v117, %v127
    %vm129 = vcmask 64512
    %130 = vst.msk [vmem:[%s2] sm:$0xff] %vm129, %v128
  $region17: #{intermodal_loss.3} parent=0 // pred_fallthru
    _
  // Predicated region
  $region18: #{intermodal_loss.3} parent=0 // pred_check
    %p131 = pneg %p113
  $region19: #{intermodal_loss.3} parent=0 // pred_check_branch
    %133 = sbr.rel (%p131) target = $region21
  $region20: #{intermodal_loss.3} parent=0 // pred_region
    %v134 = vld [vmem:[%s2] sm:$0xff]
    %v135 = vadd.f32 %v107, 0.0
    %v136 = vadd.f32 %v134, %v135
    %vm137 = vcmask 64512
    %138 = vst.msk [vmem:[%s2] sm:$0xff] %vm137, %v136
  $region21: #{intermodal_loss.3} parent=0 // pred_fallthru
    _
  // Predicated region
  $region22: #{intermodal_loss.3} parent=0 // pred_check
    _
  $region23: #{intermodal_loss.3} parent=0 // pred_check_branch
    %140 = sbr.rel (0) target = $region25
  $region24: #{intermodal_loss.3} parent=0 // pred_region
    _
  $region25: #{intermodal_loss.3} parent=0 // pred_fallthru
    _
  // Predicated region
  $region26: #{intermodal_loss.3} parent=0 // pred_check
    _
  $region27: #{intermodal_loss.3} parent=0 // pred_check_branch
    %142 = sbr.rel (0) target = $region29
  $region28: #{intermodal_loss.3} parent=0 // pred_region
    _
  $region29: #{intermodal_loss.3} parent=0 // pred_fallthru
    _

// kernel: intermodal_loss.2
$region0: #{intermodal_loss.2}
  #allocation0 [shape = 'u32[]', space=smem, size = 0x4, offset = 0x4, fixed_abs, tag = 'smem constant byte address 0x4 - core index']
  #allocation1 [shape = 'u32[144,128]{1,0:T(1,128)}', space=vmem, size = 0x12000, scoped, tag = 'internal scratch']
  %s0 = inlined_call_operand.hbm [shape: f32[8,32], index: 0, kind: input, shape index: {}]
  %s1 = inlined_call_operand.hbm [shape: f32[8,32], index: 1, kind: input, shape index: {}]
  %s2 = inlined_call_operand.vmem [shape: f32[8,32], index: 2, kind: output, shape index: {0}]
  %s3 = inlined_call_operand.vmem [shape: f32[8,32], index: 3, kind: output, shape index: {1}]
  %s4 = inlined_call_operand.vmem [shape: f32[8,1], index: 4, kind: output, shape index: {2}]
  %5 = xla_tuple %s2, %s3, %s4
  %s6 = sld [smem:[#allocation0]]
  $region42: #{intermodal_loss.2} parent=0
    _
  %s8 = ssub.s32 1, %s6
  %s9 = scalar_select 0, %s8, %s6
  $region1: #{intermodal_loss.2} parent=0
    #allocation2 [shape = 'u8[4096]{0}', space=vmem, size = 0x1000, scoped, tag = 'input window, operand 0, single buffered']
    #allocation3 [shape = 's32[1]{0}', space=sflag, size = 0x4, scoped, tag = 'scoped memory for intermodal_loss.2']
    #allocation4 [shape = 'u8[4096]{0}', space=vmem, size = 0x1000, scoped, tag = 'input window, operand 1, single buffered']
    #allocation5 [shape = 's32[1]{0}', space=sflag, size = 0x4, scoped, tag = 'scoped memory for intermodal_loss.2']
    %10 = vsyncpa [#allocation3], 0
    %11 = vsyncpa [#allocation5], 0
    // Predicated region
    $region2: #{intermodal_loss.2} parent=1 // pred_check
      _
    $region3: #{intermodal_loss.2} parent=1 // pred_check_branch
      %13 = sbr.rel (0) target = $region5
    $region4: #{intermodal_loss.2} parent=1 // pred_region
      %s15 = ssub.s32 128, 128
      %16 = vsyncadd [#allocation3], %s15
      %s18 = sshll.u32 [#allocation2], 4
      %s19 = int_to_ptr.vmem [resolvable:$true] %s18
      %21 = dma.hbm_to_vmem [thread:$0]  %s0, 128, %s19, [#allocation3]
    $region5: #{intermodal_loss.2} parent=1 // pred_fallthru
      _
    // Predicated region
    $region6: #{intermodal_loss.2} parent=1 // pred_check
      _
    $region7: #{intermodal_loss.2} parent=1 // pred_check_branch
      %23 = sbr.rel (0) target = $region9
    $region8: #{intermodal_loss.2} parent=1 // pred_region
      %s25 = ssub.s32 128, 128
      %26 = vsyncadd [#allocation5], %s25
      %s28 = sshll.u32 [#allocation4], 4
      %s29 = int_to_ptr.vmem [resolvable:$true] %s28
      %31 = dma.hbm_to_vmem [thread:$0]  %s1, 128, %s29, [#allocation5]
    $region9: #{intermodal_loss.2} parent=1 // pred_fallthru
      _
    // Predicated region
    $region10: #{intermodal_loss.2} parent=1 // pred_check
      _
    $region11: #{intermodal_loss.2} parent=1 // pred_check_branch
      %33 = sbr.rel (0) target = $region13
    $region12: #{intermodal_loss.2} parent=1 // pred_region
      %34 = dma.done [#allocation3], 128
    $region13: #{intermodal_loss.2} parent=1 // pred_fallthru
      _
    // Predicated region
    $region14: #{intermodal_loss.2} parent=1 // pred_check
      _
    $region15: #{intermodal_loss.2} parent=1 // pred_check_branch
      %36 = sbr.rel (0) target = $region17
    $region16: #{intermodal_loss.2} parent=1 // pred_region
      %37 = dma.done [#allocation5], 128
    $region17: #{intermodal_loss.2} parent=1 // pred_fallthru
      _
    %v38 = vld [vmem:[#allocation2] sm:$0xff]
    %v39 = vld [vmem:[#allocation4] sm:$0xff]
    %v40 = vmul.f32 %v38, %v38
    %vm41 = vcmask 261120
    %v42 = vsel %vm41, %v40, 0.0
    %43 = vadd.xlane.f32.xlu0 %v42
    %v44 = vpop.xlane.xlu0 %43
    %v45 = vmax.f32 %v44, 1e-24
    %v46 = vrsqrt.pop %v45
    %v47 = vmul.f32 %v38, %v46
    %v48 = vmul.f32 %v39, %v39
    %v49 = vsel %vm41, %v48, 0.0
    %50 = vadd.xlane.f32.xlu0 %v49
    %v51 = vpop.xlane.xlu0 %50
    %v52 = vmax.f32 %v51, 1e-24
    %v53 = vrsqrt.pop %v52
    %v54 = vmul.f32 %v39, %v53
    %55 = vst.msk [vmem:[%s2] sm:$0xff] %vm41, %v47
    %56 = vst.msk [vmem:[%s3] sm:$0xff] %vm41, %v54
    %v57 = vmul.f32 %v47, %v54
    %v58 = vsel %vm41, %v57, 0.0
    %59 = vadd.xlane.f32.xlu0 %v58
    %v60 = vpop.xlane.xlu0 %59
    %v61 = vsub.f32 0.2, %v60
    %v62 = vmul.f32 %v61, 1.442695
    %v63 = vpow.pop %v62
    %v64 = vadd.f32 %v63, 1.0
    %v65 = vlog2.pop %v64
    %v66 = vmul.f32 %v65, 0.6931472
    %v67 = vmul.f32 -0.5, %v63
    %v68 = vadd.f32 %v67, 1.0
    %v69 = vmul.f32 %v68, %v63
    %v70 = vand.u32 2147483647, %v63
    %vm71 = vcmp.lt.f32.partialorder %v70, 0.0004427343
    %v72 = vsel %vm71, %v69, %v66
    %vm73 = vcmask 7168
    %74 = vst.msk [vmem:[%s4] sm:$0xff] %vm73, %v72
    // Predicated region
    $region18: #{intermodal_loss.2} parent=1 // pred_check
      _
    $region19: #{intermodal_loss.2} parent=1 // pred_check_branch
      %76 = sbr.rel (0) target = $region21
    $region20: #{intermodal_loss.2} parent=1 // pred_region
      _
    $region21: #{intermodal_loss.2} parent=1 // pred_fallthru
      _
    // Predicated region
    $region22: #{intermodal_loss.2} parent=1 // pred_check
      _
    $region23: #{intermodal_loss.2} parent=1 // pred_check_branch
      %78 = sbr.rel (0) target = $region25
    $region24: #{intermodal_loss.2} parent=1 // pred_region
      _
    $region25: #{intermodal_loss.2} parent=1 // pred_fallthru
      _
    // Predicated region
    $region26: #{intermodal_loss.2} parent=1 // pred_check
      _
    $region27: #{intermodal_loss.2} parent=1 // pred_check_branch
      %80 = sbr.rel (0) target = $region29
    $region28: #{intermodal_loss.2} parent=1 // pred_region
      _
    $region29: #{intermodal_loss.2} parent=1 // pred_fallthru
      _
    // Predicated region
    $region30: #{intermodal_loss.2} parent=1 // pred_check
      _
    $region31: #{intermodal_loss.2} parent=1 // pred_check_branch
      %82 = sbr.rel (0) target = $region33
    $region32: #{intermodal_loss.2} parent=1 // pred_region
      _
    $region33: #{intermodal_loss.2} parent=1 // pred_fallthru
      _
    // Predicated region
    $region34: #{intermodal_loss.2} parent=1 // pred_check
      _
    $region35: #{intermodal_loss.2} parent=1 // pred_check_branch
      %84 = sbr.rel (0) target = $region37
    $region36: #{intermodal_loss.2} parent=1 // pred_region
      _
    $region37: #{intermodal_loss.2} parent=1 // pred_fallthru
      _
    // Predicated region
    $region38: #{intermodal_loss.2} parent=1 // pred_check
      _
    $region39: #{intermodal_loss.2} parent=1 // pred_check_branch
      %86 = sbr.rel (0) target = $region41
    $region40: #{intermodal_loss.2} parent=1 // pred_region
      _
    $region41: #{intermodal_loss.2} parent=1 // pred_fallthru
      _
    %87 = vsyncpa [#allocation3], 1
    %88 = vsyncpa [#allocation5], 1

</llo_original>
